<compile_context>
chip_gen: v7x
topology: tpu7x:2x2x1
jax: 0.10.0
libtpu: 0.0.40
codegen_flags: <defaults>
</compile_context>

<pallas_src>
import functools

import jax
import jax.numpy as jnp
from jax import lax
from jax.experimental import pallas as pl
from jax.experimental.pallas import tpu as pltpu


def _lora_kernel(x_ref, w1_ref, w2t_ref, o_ref, h_ref, *, compute_dtype):
    # x_ref   : (tm, in_size)    input tile
    # w1_ref  : (rank, in_size)  fc1.weight, native lane-dense layout
    # w2t_ref : (rank, tn)       fc2.weight^T tile (lane-dense)
    # o_ref   : (tm, tn)         output tile
    # h_ref   : (tm, rank) f32   VMEM scratch caching x @ W1^T across N steps

    # The first matmul sweeps the whole in_size K dimension; compute it once
    # per batch tile (first N step) and reuse the cached result afterwards.
    @pl.when(pl.program_id(1) == 0)
    def _():
        h_ref[...] = lax.dot_general(
            x_ref[...].astype(compute_dtype),
            w1_ref[...],
            dimension_numbers=(((1,), (1,)), ((), ())),
            preferred_element_type=jnp.float32,
        )

    # Tiny-K second matmul: h @ W2^T for this out_size tile.
    # TODO(synk): on v7x a rank-unrolled VPU outer product may beat this
    # low-fill MXU matmul; keep the MXU form until measured.
    h = h_ref[...].astype(compute_dtype)
    y = jnp.dot(h, w2t_ref[...], preferred_element_type=jnp.float32)
    o_ref[...] = y.astype(o_ref.dtype)


def _cdiv(a, b):
    return (a + b - 1) // b


def _round_up(x, m):
    return ((x + m - 1) // m) * m


def _vmem_capacity_bytes():
    try:
        return int(pltpu.get_tpu_info().vmem_capacity_bytes)
    except Exception:
        # Conservative fallback = v7x per-TensorCore VMEM; safe everywhere.
        return 64 * 1024 * 1024


def _default_tiles(m_padded, in_size, out_size, in_itemsize, out_itemsize,
                   tile_budget, tn_cap):
    # Lane-dense output tiles: full out_size when it fits, else tn_cap.
    tn = out_size if out_size <= tn_cap else tn_cap
    # Joint per-row VMEM cost: double-buffered x row + double-buffered out row
    # + f32 h-scratch row (rank lane-pads to 128).
    per_row = 2 * in_size * in_itemsize + 2 * tn * out_itemsize + 128 * 4
    tm = tile_budget // per_row
    tm = max(8, min(1024, (tm // 8) * 8))
    # Keep at least two M blocks when possible so megacore (v7x) can split the
    # batch over both TensorCores; extra step cost elsewhere is ~0.35 us.
    if m_padded >= 16:
        tm = min(tm, _round_up(_cdiv(m_padded, 2), 8))
    tm = min(tm, m_padded)
    return tm, tn


def lora_forward(x, w1, w2, *, tm=None, tn=None, compute_dtype=None,
                 out_dtype=None):
    """LoRA forward: fc2(fc1(x)) with bias-free Linear layers.

    x : (..., in_size); w1 = fc1.weight (rank, in_size); w2 = fc2.weight
    (out_size, rank). Returns (..., out_size).
    """
    orig_shape = x.shape
    in_size = orig_shape[-1]
    x2 = x.reshape(-1, in_size)
    M = x2.shape[0]

    rank, in_size_w = w1.shape
    out_size, rank_w = w2.shape
    assert in_size_w == in_size and rank_w == rank

    if compute_dtype is None:
        # bf16 activations -> bf16 MXU operands (f32 accumulation); f32
        # activations stay exact. Pass compute_dtype=jnp.bfloat16 explicitly
        # to force the cheaper MXU path on f32 inputs.
        compute_dtype = x2.dtype
    if out_dtype is None:
        out_dtype = x2.dtype

    # Lane-dense weight layouts: w1 kept native (rank, in_size); the tiny w2
    # transposed once in the wrapper to (rank, out_size).
    w1c = w1.astype(compute_dtype)
    w2t = w2.T.astype(compute_dtype)

    # Pad the batch to a sublane multiple of 8 (only when needed).
    m_padded = _round_up(M, 8)
    if m_padded != M:
        x2 = jnp.pad(x2, ((0, m_padded - M), (0, 0)))

    # Generation-aware VMEM budgeting.
    vmem_cap = _vmem_capacity_bytes()
    vmem_limit = int(vmem_cap * 0.80)        # headroom for Mosaic internals
    tile_budget = int(vmem_limit * 0.80)     # weights + slack stay outside
    tn_cap = 2048 if vmem_cap <= 64 * 1024 * 1024 else 4096

    in_itemsize = jnp.dtype(x2.dtype).itemsize
    out_itemsize = jnp.dtype(out_dtype).itemsize
    d_tm, d_tn = _default_tiles(m_padded, in_size, out_size, in_itemsize,
                                out_itemsize, tile_budget, tn_cap)
    if tm is None:
        tm = d_tm
    if tn is None:
        tn = d_tn

    grid = (_cdiv(m_padded, tm), _cdiv(out_size, tn))

    kernel = functools.partial(_lora_kernel, compute_dtype=compute_dtype)

    out = pl.pallas_call(
        kernel,
        out_shape=jax.ShapeDtypeStruct((m_padded, out_size), out_dtype),
        grid_spec=pltpu.PrefetchScalarGridSpec(
            num_scalar_prefetch=0,
            grid=grid,
            in_specs=[
                # x: tiled over batch only; block index invariant over the
                # inner N axis so the same x tile is reused (no re-DMA per j).
                pl.BlockSpec((tm, in_size), lambda i, j: (i, 0)),
                # fc1 weight, whole, native (rank, in_size) layout.
                pl.BlockSpec((rank, in_size), lambda i, j: (0, 0)),
                # fc2 weight (transposed), tiled over out_size.
                pl.BlockSpec((rank, tn), lambda i, j: (0, j)),
            ],
            out_specs=pl.BlockSpec((tm, tn), lambda i, j: (i, j)),
            scratch_shapes=[pltpu.VMEM((tm, rank), jnp.float32)],
        ),
        compiler_params=pltpu.CompilerParams(
            # M axis megacore-sharded; N axis must stay unsharded ("arbitrary")
            # so each core walks j from 0 for its own i blocks and the cached
            # h scratch is always valid.
            dimension_semantics=("parallel", "arbitrary"),
            vmem_limit_bytes=vmem_limit,
        ),
    )(x2, w1c, w2t)

    if m_padded != M:
        out = out[:M]
    return out.reshape(*orig_shape[:-1], out_size)


if __name__ == "__main__":
    # Small shapes consistent with the module (in_size, out_size, rank=2).
    batch, in_size, out_size, rank = 16, 256, 256, 2

    key = jax.random.PRNGKey(0)
    kx, k1, k2 = jax.random.split(key, 3)

    x = jax.random.normal(kx, (batch, in_size), dtype=jnp.float32)
    # PyTorch nn.Linear weight shapes:
    #   fc1.weight: (rank, in_size), fc2.weight: (out_size, rank)
    w1 = jax.random.normal(k1, (rank, in_size), dtype=jnp.float32) * 0.02
    w2 = jax.random.normal(k2, (out_size, rank), dtype=jnp.float32) * 0.02

    # f32 path: exact against the reference.
    out = jax.block_until_ready(lora_forward(x, w1, w2))
    ref = (x @ w1.T) @ w2.T
    assert out.shape == (batch, out_size)
    assert jnp.allclose(out, ref, atol=1e-5, rtol=1e-5)

    # bf16 activation path (HBM-bandwidth win): bf16 MXU operands, f32 accum.
    x_bf = x.astype(jnp.bfloat16)
    w1_bf = w1.astype(jnp.bfloat16)
    w2_bf = w2.astype(jnp.bfloat16)
    out_bf = jax.block_until_ready(lora_forward(x_bf, w1_bf, w2_bf))
    ref_bf = (x_bf.astype(jnp.float32) @ w1_bf.astype(jnp.float32).T) @ \
        w2_bf.astype(jnp.float32).T
    assert out_bf.dtype == jnp.bfloat16
    assert jnp.allclose(out_bf.astype(jnp.float32), ref_bf,
                        atol=5e-3, rtol=5e-2)

    print("KERNEL_OK")
</pallas_src>

<mosaic_0001>
module attributes {stable_mosaic.version = 11 : i64} {
  func.func @_lora_kernel(%arg0: i32, %arg1: i32, %arg2: memref<8x256xf32, #tpu.memory_space<vmem>>, %arg3: memref<2x256xf32, #tpu.memory_space<vmem>>, %arg4: memref<2x256xf32, #tpu.memory_space<vmem>>, %arg5: memref<8x256xf32, #tpu.memory_space<vmem>>, %arg6: memref<8x2xf32, #tpu.memory_space<vmem>>) attributes {dimension_semantics = [#tpu.dimension_semantics<parallel>, #tpu.dimension_semantics<arbitrary>], iteration_bounds = array<i64: 2, 1>, scalar_prefetch = 0 : i64, scratch_operands = 1 : i64, tpu.core_type = #tpu.core_type<tc>, window_params = [{transform_indices = @transform_0, window_bounds = array<i64: 8, 256>}, {pipeline_mode = #tpu.pipeline_mode<synchronous>, transform_indices = @transform_1, window_bounds = array<i64: 2, 256>}, {transform_indices = @transform_2, window_bounds = array<i64: 2, 256>}, {transform_indices = @transform_3, window_bounds = array<i64: 8, 256>}]} {
    %c0_i32 = arith.constant 0 : i32
    %0 = arith.cmpi eq, %arg1, %c0_i32 : i32
    %1 = arith.extui %0 : i1 to i32
    %c0_i32_0 = arith.constant 0 : i32
    %2 = arith.cmpi ne, %1, %c0_i32_0 : i32
    scf.if %2 {
      %c0_6 = arith.constant 0 : index
      %c0_7 = arith.constant 0 : index
      %7 = vector.load %arg2[%c0_6, %c0_7] : memref<8x256xf32, #tpu.memory_space<vmem>>, vector<8x256xf32>
      %c0_8 = arith.constant 0 : index
      %c0_9 = arith.constant 0 : index
      %8 = vector.load %arg3[%c0_8, %c0_9] : memref<2x256xf32, #tpu.memory_space<vmem>>, vector<2x256xf32>
      %cst_10 = arith.constant dense<0.000000e+00> : vector<8x2xf32>
      %9 = tpu.matmul %7, %8, %cst_10 {dimension_numbers = #tpu.dot_dimension_numbers<[1], [1], [0], [0], [0, 0, 1, 0], [], []>} : vector<8x256xf32>, vector<2x256xf32>, vector<8x2xf32> -> vector<8x2xf32>
      %c0_11 = arith.constant 0 : index
      %c0_12 = arith.constant 0 : index
      %10 = vector.load %arg6[%c0_11, %c0_12] : memref<8x2xf32, #tpu.memory_space<vmem>>, vector<8x2xf32>
      tpu.vector_store %arg6[%c0_11, %c0_12], %9 {strides = array<i32>} : memref<8x2xf32, #tpu.memory_space<vmem>>, vector<8x2xf32>,
    } else {
    }
    %c0 = arith.constant 0 : index
    %c0_1 = arith.constant 0 : index
    %3 = vector.load %arg6[%c0, %c0_1] : memref<8x2xf32, #tpu.memory_space<vmem>>, vector<8x2xf32>
    %c0_2 = arith.constant 0 : index
    %c0_3 = arith.constant 0 : index
    %4 = vector.load %arg4[%c0_2, %c0_3] : memref<2x256xf32, #tpu.memory_space<vmem>>, vector<2x256xf32>
    %cst = arith.constant dense<0.000000e+00> : vector<8x256xf32>
    %5 = tpu.matmul %3, %4, %cst {dimension_numbers = #tpu.dot_dimension_numbers<[1], [0], [0], [1], [0, 0, 1, 1], [], []>} : vector<8x2xf32>, vector<2x256xf32>, vector<8x256xf32> -> vector<8x256xf32>
    %c0_4 = arith.constant 0 : index
    %c0_5 = arith.constant 0 : index
    %6 = vector.load %arg5[%c0_4, %c0_5] : memref<8x256xf32, #tpu.memory_space<vmem>>, vector<8x256xf32>
    tpu.vector_store %arg5[%c0_4, %c0_5], %5 {strides = array<i32>} : memref<8x256xf32, #tpu.memory_space<vmem>>, vector<8x256xf32>,
    return
  }
  func.func @transform_0(%arg0: i32, %arg1: i32) -> (i32, i32) {
    %c0_i32 = arith.constant 0 : i32
    %c0_i32_0 = arith.constant 0 : i32
    return %arg0, %c0_i32 : i32, i32
  }
  func.func @transform_1(%arg0: i32, %arg1: i32) -> (i32, i32) {
    %c0_i32 = arith.constant 0 : i32
    %c0_i32_0 = arith.constant 0 : i32
    %c0_i32_1 = arith.constant 0 : i32
    return %c0_i32, %c0_i32_0 : i32, i32
  }
  func.func @transform_2(%arg0: i32, %arg1: i32) -> (i32, i32) {
    %c0_i32 = arith.constant 0 : i32
    %c0_i32_0 = arith.constant 0 : i32
    return %c0_i32, %arg1 : i32, i32
  }
  func.func @transform_3(%arg0: i32, %arg1: i32) -> (i32, i32) {
    %c0_i32 = arith.constant 0 : i32
    return %arg0, %arg1 : i32, i32
  }
}

</mosaic_0001>

<llo_original>
// kernel: tpu_custom_call.1
$region0: #{tpu_custom_call.1}
  #allocation0 [shape = 'u32[]', space=smem, size = 0x4, offset = 0x4, fixed_abs, tag = 'smem constant byte address 0x4 - core index']
  #allocation1 [shape = 'u32[144,128]{1,0:T(1,128)}', space=vmem, size = 0x12000, scoped, tag = 'internal scratch']
  #allocation2 [shape = 'f32[8,2]{1,0:T(8,128)}', space=vmem, size = 0x1000, scoped, tag = 'scratch operand']
  %s0 = inlined_call_operand.hbm [shape: f32[16,256], index: 0, kind: input, shape index: {}]
  %s1 = inlined_call_operand.hbm [shape: f32[2,256], index: 1, kind: input, shape index: {}]
  %s2 = inlined_call_operand.vmem [shape: f32[2,256], index: 2, kind: input, shape index: {}]
  %s3 = inlined_call_operand.hbm [shape: f32[16,256], index: 3, kind: output, shape index: {}]
  %s4 = sld [smem:[#allocation0]]
  $region57: #{tpu_custom_call.1} parent=0
    _
  %s6 = ssub.s32 1, %s4
  %s7 = scalar_select 0, %s6, %s4
  $region1: #{tpu_custom_call.1} parent=0
    #allocation3 [shape = 'u8[16384]{0}', space=vmem, size = 0x4000, scoped, tag = 'input window, operand 0']
    #allocation4 [shape = 's32[2]{0}', space=sflag, size = 0x8, scoped, tag = 'scoped memory for tpu_custom_call.1']
    #allocation5 [shape = 's32[2]{0}', space=sflag, size = 0x8, scoped, tag = 'scoped memory for tpu_custom_call.1']
    #allocation6 [shape = 'u8[2048]{0}', space=vmem, size = 0x800, scoped, tag = 'input window, operand 1, single buffered']
    #allocation7 [shape = 's32[1]{0}', space=sflag, size = 0x4, scoped, tag = 'scoped memory for tpu_custom_call.1']
    #allocation8 [shape = 'u8[16384]{0}', space=vmem, size = 0x4000, scoped, tag = 'output window, operand 0']
    %8 = vsyncpa [#allocation4], 0
    %s9 = scalar_lea.sflag [#allocation4], 1
    %10 = vsyncpa %s9, 0
    %11 = vsyncpa [#allocation7], 0
    %12 = vsyncpa [#allocation5], 0
    %s13 = scalar_lea.sflag [#allocation5], 1
    %14 = vsyncpa %s13, 0
    loop: start=0, step=1, limit=4
    $region2: #{tpu_custom_call.1} parent=1 // loop_pre_header
      _
    $region3: #{tpu_custom_call.1} parent=1 // loop_header
      %s16 = sphi 0, %s20
      %p17 = scmp.ge.s32.totalorder %s16, 4
      %s23 = sphi 0, %s35
      %s24 = sphi 0, %s31
      %s25 = sphi 0, %s23
      %s26 = sphi 0, %s24
      %s27 = sphi 0, %s25
      %s28 = sphi 0, %s26
      %s38 = sphi 0, %s40
      %s41 = sphi 0, %s38
      %s42 = sphi 0, %s41
      %s58 = sphi 0, %s42
      %s62 = sphi 0, %s62
      %s64 = sphi 0, %s62
      %s65 = sphi 0, %s64
      %s79 = sphi 0, %s65
      %s85 = sphi 0, %s87
      %s88 = sphi 0, %s85
      %s89 = sphi 0, %s88
      %s105 = sphi 0, %s89
      %s113 = sphi 0, %s115
      %s116 = sphi 0, %s113
      %s117 = sphi 0, %s116
      %s133 = sphi 0, %s117
    $region4: #{tpu_custom_call.1} parent=1 // loop_header_branch
      %19 = sbr.rel (%p17) target = $region8
    $region5: #{tpu_custom_call.1} parent=1 // loop_body
      %s21 = ssub.s32 %s16, 1
      %s22 = ssub.s32 %s16, 2
      %s29 = sadd.s32 1, %s24
      %p30 = scmp.ge.s32.totalorder %s29, 1
      %s31 = scalar_select %p30, 0, %s29
      %s32 = sadd.s32 1, %s23
      %s33 = scalar_select %p30, %s32, %s23
      %p34 = scmp.ge.s32.totalorder %s33, 2
      %s35 = scalar_select %p34, 0, %s33
      %s36 = ssub.s32 %s23, %s35
      %p37 = scmp.eq.s32.totalorder %s36, 0
      %s39 = sadd.s32 %s38, 1
      %s40 = scalar_select %p37, %s38, %s39
      %p43 = pneg %p37
      %p44 = scmp.eq.s32.totalorder %s16, 1
      %p45 = por %p43, %p44
      %p46 = scmp.ne.s32.totalorder %s38, %s41
      %p47 = scmp.eq.s32.totalorder %s16, 0
      %p48 = por %p46, %p47
      %p49 = scmp.ne.s32.totalorder %s38, %s41
      %p50 = scmp.eq.s32.totalorder %s21, 1
      %p51 = por %p49, %p50
      %p52 = scmp.ne.s32.totalorder %s41, %s42
      %p53 = scmp.eq.s32.totalorder %s21, 0
      %p54 = por %p52, %p53
      %p55 = scmp.ne.s32.totalorder %s41, %s42
      %p56 = scmp.eq.s32.totalorder %s22, 1
      %p57 = por %p55, %p56
      %p59 = scmp.ne.s32.totalorder %s42, %s58
      %p60 = scmp.eq.s32.totalorder %s22, 0
      %p61 = por %p59, %p60
      %s63 = sadd.s32 %s62, 1
      %p66 = scmp.eq.s32.totalorder %s16, 1
      %p67 = scmp.ne.s32.totalorder %s62, %s64
      %p68 = scmp.eq.s32.totalorder %s16, 0
      %p69 = por %p67, %p68
      %p70 = scmp.ne.s32.totalorder %s62, %s64
      %p71 = scmp.eq.s32.totalorder %s21, 1
      %p72 = por %p70, %p71
      %p73 = scmp.ne.s32.totalorder %s64, %s65
      %p74 = scmp.eq.s32.totalorder %s21, 0
      %p75 = por %p73, %p74
      %p76 = scmp.ne.s32.totalorder %s64, %s65
      %p77 = scmp.eq.s32.totalorder %s22, 1
      %p78 = por %p76, %p77
      %p80 = scmp.ne.s32.totalorder %s65, %s79
      %p81 = scmp.eq.s32.totalorder %s22, 0
      %p82 = por %p80, %p81
      %s83 = ssub.s32 %s24, %s31
      %p84 = scmp.eq.s32.totalorder %s83, 0
      %s86 = sadd.s32 %s85, 1
      %s87 = scalar_select %p84, %s85, %s86
      %p90 = pneg %p84
      %p91 = scmp.eq.s32.totalorder %s16, 1
      %p92 = por %p90, %p91
      %p93 = scmp.ne.s32.totalorder %s85, %s88
      %p94 = scmp.eq.s32.totalorder %s16, 0
      %p95 = por %p93, %p94
      %p96 = scmp.ne.s32.totalorder %s85, %s88
      %p97 = scmp.eq.s32.totalorder %s21, 1
      %p98 = por %p96, %p97
      %p99 = scmp.ne.s32.totalorder %s88, %s89
      %p100 = scmp.eq.s32.totalorder %s21, 0
      %p101 = por %p99, %p100
      %p102 = scmp.ne.s32.totalorder %s88, %s89
      %p103 = scmp.eq.s32.totalorder %s22, 1
      %p104 = por %p102, %p103
      %p106 = scmp.ne.s32.totalorder %s89, %s105
      %p107 = scmp.eq.s32.totalorder %s22, 0
      %p108 = por %p106, %p107
      %s109 = ssub.s32 %s23, %s35
      %s110 = ssub.s32 %s24, %s31
      %s111 = sor.u32 %s109, %s110
      %p112 = scmp.eq.s32.totalorder %s111, 0
      %s114 = sadd.s32 %s113, 1
      %s115 = scalar_select %p112, %s113, %s114
      %p118 = pneg %p112
      %p119 = scmp.eq.s32.totalorder %s16, 1
      %p120 = por %p118, %p119
      %p121 = scmp.ne.s32.totalorder %s113, %s116
      %p122 = scmp.eq.s32.totalorder %s16, 0
      %p123 = por %p121, %p122
      %p124 = scmp.ne.s32.totalorder %s113, %s116
      %p125 = scmp.eq.s32.totalorder %s21, 1
      %p126 = por %p124, %p125
      %p127 = scmp.ne.s32.totalorder %s116, %s117
      %p128 = scmp.eq.s32.totalorder %s21, 0
      %p129 = por %p127, %p128
      %p130 = scmp.ne.s32.totalorder %s116, %s117
      %p131 = scmp.eq.s32.totalorder %s22, 1
      %p132 = por %p130, %p131
      %p134 = scmp.ne.s32.totalorder %s117, %s133
      %p135 = scmp.eq.s32.totalorder %s22, 0
      %p136 = por %p134, %p135
      %p137 = scmp.le.s32.totalorder 1, %s16
      %p138 = scmp.lt.s32.totalorder %s16, 3
      %p139 = pnand %p137, %p138
      %p140 = pneg %p139
      // Predicated region
      $region9: #{tpu_custom_call.1} parent=5 // pred_check
        _
      $region10: #{tpu_custom_call.1} parent=5 // pred_check_branch
        %142 = sbr.rel (%p139) target = $region12
      $region11: #{tpu_custom_call.1} parent=5 // pred_region
        %s143 = ssub.s32 %s16, 1
        // Predicated region
        $region13: #{tpu_custom_call.1} parent=11 // pred_check
          %p144 = pneg %p75
        $region14: #{tpu_custom_call.1} parent=11 // pred_check_branch
          %146 = sbr.rel (%p144) target = $region16
        $region15: #{tpu_custom_call.1} parent=11 // pred_region
          %s148 = ssub.s32 64, 64
          %149 = vsyncadd [#allocation7], %s148
          %s151 = sshll.u32 [#allocation6], 4
          %s152 = int_to_ptr.vmem [resolvable:$true] %s151
          %154 = dma.hbm_to_vmem [thread:$0]  %s1, 64, %s152, [#allocation7]
        $region16: #{tpu_custom_call.1} parent=11 // pred_fallthru
          _
        // Predicated region
        $region17: #{tpu_custom_call.1} parent=11 // pred_check
          %p155 = pneg %p101
        $region18: #{tpu_custom_call.1} parent=11 // pred_check_branch
          %157 = sbr.rel (%p155) target = $region20
        $region19: #{tpu_custom_call.1} parent=11 // pred_region
          %s158 = smul.u32 2, %s26
          %p159 = scmp.lt.s32.totalorder %s158, 1
          %s160 = scalar_select %p159, %s158, 1
          %s161 = smul.addr %s160, 2
          %s162 = scalar_lea.vmem %s2, %s161
          %s163 = smul.u32 2, %s26
        $region20: #{tpu_custom_call.1} parent=11 // pred_fallthru
          _
      $region12: #{tpu_custom_call.1} parent=5 // pred_fallthru
        _
      %p164 = scmp.lt.s32.totalorder %s16, 2
      // Predicated region
      $region21: #{tpu_custom_call.1} parent=5 // pred_check
        %p165 = pneg %p164
      $region22: #{tpu_custom_call.1} parent=5 // pred_check_branch
        %167 = sbr.rel (%p165) target = $region24
      $region23: #{tpu_custom_call.1} parent=5 // pred_region
        // Predicated region
        $region25: #{tpu_custom_call.1} parent=23 // pred_check
          %p168 = pneg %p48
        $region26: #{tpu_custom_call.1} parent=23 // pred_check_branch
          %170 = sbr.rel (%p168) target = $region28
        $region27: #{tpu_custom_call.1} parent=23 // pred_region
          %s171 = sand.u32 %s38, 1
          %s172 = scalar_lea.sflag [#allocation4], %s171
          %s173 = sand.u32 %s38, 1
          %s174 = smul.addr %s173, 16
          %s175 = scalar_lea.vmem [#allocation3], %s174
          %s177 = ssub.s32 256, 256
          %178 = vsyncadd %s172, %s177
          %s179 = smul.addr %s23, 2
          %s180 = smul.addr %s179, 128
          %s181 = scalar_lea.hbm %s0, %s180
          %s183 = sshll.u32 %s175, 4
          %s184 = int_to_ptr.vmem [resolvable:$true] %s183
          %186 = dma.hbm_to_vmem [thread:$0]  %s181, 256, %s184, %s172
        $region28: #{tpu_custom_call.1} parent=23 // pred_fallthru
          _
      $region24: #{tpu_custom_call.1} parent=5 // pred_fallthru
        _
      %p187 = scmp.le.s32.totalorder 1, %s16
      %p188 = scmp.lt.s32.totalorder %s16, 3
      %p189 = pnand %p187, %p188
      %p190 = pneg %p189
      // Predicated region
      $region29: #{tpu_custom_call.1} parent=5 // pred_check
        _
      $region30: #{tpu_custom_call.1} parent=5 // pred_check_branch
        %192 = sbr.rel (%p189) target = $region32
      $region31: #{tpu_custom_call.1} parent=5 // pred_region
        %s193 = ssub.s32 %s16, 1
        %s194 = sand.u32 %s41, 1
        %s195 = scalar_lea.sflag [#allocation4], %s194
        %s196 = sand.u32 %s41, 1
        %s197 = smul.addr %s196, 16
        %s198 = scalar_lea.vmem [#allocation3], %s197
        // Predicated region
        $region33: #{tpu_custom_call.1} parent=31 // pred_check
          %p199 = pneg %p54
        $region34: #{tpu_custom_call.1} parent=31 // pred_check_branch
          %201 = sbr.rel (%p199) target = $region36
        $region35: #{tpu_custom_call.1} parent=31 // pred_region
          %202 = dma.done %s195, 256
        $region36: #{tpu_custom_call.1} parent=31 // pred_fallthru
          _
        // Predicated region
        $region37: #{tpu_custom_call.1} parent=31 // pred_check
          %p203 = pneg %p75
        $region38: #{tpu_custom_call.1} parent=31 // pred_check_branch
          %205 = sbr.rel (%p203) target = $region40
        $region39: #{tpu_custom_call.1} parent=31 // pred_region
          %206 = dma.done [#allocation7], 64
        $region40: #{tpu_custom_call.1} parent=31 // pred_fallthru
          _
        %s207 = sand.u32 %s41, 1
        %s208 = scalar_lea.sflag [#allocation4], %s207
        %s209 = sand.u32 %s41, 1
        %s210 = smul.addr %s209, 16
        %s211 = scalar_lea.vmem [#allocation3], %s210
        %p212 = pneg %p54
        %p213 = pneg %p51
        %p214 = pneg %p75
        %p215 = pneg %p72
        %s216 = smul.u32 2, %s26
        %p217 = scmp.lt.s32.totalorder %s216, 1
        %s218 = scalar_select %p217, %s216, 1
        %s219 = smul.addr %s218, 2
        %s220 = scalar_lea.vmem %s2, %s219
        %p221 = pneg %p101
        %p222 = pneg %p98
        %p223 = pneg %p129
        %p224 = pneg %p126
        %s225 = sand.u32 %s116, 1
        %s226 = scalar_lea.sflag [#allocation5], %s225
        %s227 = sand.u32 %s116, 1
        %s228 = smul.addr %s227, 16
        %s229 = scalar_lea.vmem [#allocation8], %s228
        %s230 = smul.u32 2, %s26
        %p231 = scmp.lt.s32.totalorder %s230, 1
        %s232 = scalar_select %p231, %s230, 1
        %s233 = smul.addr %s232, 2
        %s234 = scalar_lea.vmem %s2, %s233
        %s235 = smul.u32 2, %s26
        %s236 = smul.u32 2, %s26
        %p237 = scmp.eq.s32.totalorder %s26, 0
        // Predicated region
        $region41: #{tpu_custom_call.1} parent=31 // pred_check
          %p238 = pneg %p237
        $region42: #{tpu_custom_call.1} parent=31 // pred_check_branch
          %240 = sbr.rel (%p238) target = $region44
        $region43: #{tpu_custom_call.1} parent=31 // pred_region
          %v241 = vld [vmem:[%s198] sm:$0xff]
          %v242 = vld [vmem:[%s198 + $0x8] sm:$0xff]
          %v243 = vld [vmem:[#allocation6] sm:$0xf]
          %v246 = vunpack.c.l.s4 1983009808
          %v247 = vunpack.c.0.s8 %v246
          %v248 = vlaneseq
          %v249 = vshrl.u32 %v248, 7
          %v250 = vsub.s32 %v247, %v249
          %v251 = vrot.slane %v243, %v250
          %v252 = vcombine.high %v251, %v251
          %255 = vmatprep.subr.mxu0 %v252
          %256 = vmatpush1.xpose.msra.mxu0 %v251
          %257 = vmatprep.subr.mxu0 0.0
          %258 = vmatpush1.xpose.msra.mxu0 0.0
          %259 = vmatprep.subr.mxu0 0.0
          %260 = vmatpush1.xpose.msra.mxu0 0.0
          %261 = vmatprep.subr.mxu0 0.0
          %262 = vmatpush1.xpose.msra.mxu0 0.0
          %263 = vmatprep.subr.mxu0 0.0
          %264 = vmatpush1.xpose.msra.mxu0 0.0
          %265 = vmatprep.subr.mxu0 0.0
          %266 = vmatpush1.xpose.msra.mxu0 0.0
          %267 = vmatprep.subr.mxu0 0.0
          %268 = vmatpush1.xpose.msra.mxu0 0.0
          %269 = vmatprep.subr.mxu0 0.0
          %270 = vmatpush1.xpose.msra.mxu0 0.0
          %271 = vmatprep.subr.mxu0 0.0
          %272 = vmatpush1.xpose.msra.mxu0 0.0
          %273 = vmatprep.subr.mxu0 0.0
          %274 = vmatpush1.xpose.msra.mxu0 0.0
          %275 = vmatprep.subr.mxu0 0.0
          %276 = vmatpush1.xpose.msra.mxu0 0.0
          %277 = vmatprep.subr.mxu0 0.0
          %278 = vmatpush1.xpose.msra.mxu0 0.0
          %279 = vmatprep.subr.mxu0 0.0
          %280 = vmatpush1.xpose.msra.mxu0 0.0
          %281 = vmatprep.subr.mxu0 0.0
          %282 = vmatpush1.xpose.msra.mxu0 0.0
          %283 = vmatprep.subr.mxu0 0.0
          %284 = vmatpush1.xpose.msra.mxu0 0.0
          %285 = vmatprep.subr.mxu0 0.0
          %286 = vmatpush1.xpose.msra.mxu0 0.0
          %287 = vmatprep.subr.mxu0 0.0
          %288 = vmatpush1.xpose.msra.mxu0 0.0
          %289 = vmatprep.subr.mxu0 0.0
          %290 = vmatpush1.xpose.msra.mxu0 0.0
          %291 = vmatprep.subr.mxu0 0.0
          %292 = vmatpush1.xpose.msra.mxu0 0.0
          %293 = vmatprep.subr.mxu0 0.0
          %294 = vmatpush1.xpose.msra.mxu0 0.0
          %295 = vmatprep.subr.mxu0 0.0
          %296 = vmatpush1.xpose.msra.mxu0 0.0
          %297 = vmatprep.subr.mxu0 0.0
          %298 = vmatpush1.xpose.msra.mxu0 0.0
          %299 = vmatprep.subr.mxu0 0.0
          %300 = vmatpush1.xpose.msra.mxu0 0.0
          %301 = vmatprep.subr.mxu0 0.0
          %302 = vmatpush1.xpose.msra.mxu0 0.0
          %303 = vmatprep.subr.mxu0 0.0
          %304 = vmatpush1.xpose.msra.mxu0 0.0
          %305 = vmatprep.subr.mxu0 0.0
          %306 = vmatpush1.xpose.msra.mxu0 0.0
          %307 = vmatprep.subr.mxu0 0.0
          %308 = vmatpush1.xpose.msra.mxu0 0.0
          %309 = vmatprep.subr.mxu0 0.0
          %310 = vmatpush1.xpose.msra.mxu0 0.0
          %311 = vmatprep.subr.mxu0 0.0
          %312 = vmatpush1.xpose.msra.mxu0 0.0
          %313 = vmatprep.subr.mxu0 0.0
          %314 = vmatpush1.xpose.msra.mxu0 0.0
          %315 = vmatprep.subr.mxu0 0.0
          %316 = vmatpush1.xpose.msra.mxu0 0.0
          %317 = vmatprep.subr.mxu0 0.0
          %318 = vmatpush1.xpose.msra.mxu0 0.0
          %319 = vmatprep.mubr.f32.mxu0 %v242
          %320 = vmatmul.mubr.f32.gmra.mrb[0].mxu0 %v241
          %v321 = vpop.f32.mrb[0].mxu0
          %v322 = vadd.f32 0.0, %v321
          %v323 = vpop.f32.mrb[0].mxu0
          %324 = vdwg.mxu0
          %vm325 = vcmask 15360
          %326 = vst.msk [vmem:[#allocation2] sm:$0xff] %vm325, %v322
        $region44: #{tpu_custom_call.1} parent=31 // pred_fallthru
          _
        %v327 = vld [vmem:[#allocation2] sm:$0xff]
        %v328 = vld [vmem:[%s234] sm:$0xf]
        %v331 = vunpack.c.l.s4 1983009808
        %v332 = vunpack.c.0.s8 %v331
        %v333 = vlaneseq
        %v334 = vshrl.u32 %v333, 7
        %v335 = vsub.s32 %v332, %v334
        %v336 = vrot.slane %v328, %v335
        %v337 = vcombine.high %v336, %v336
        %vm338 = vcmask 15360
        %v340 = vsel %vm338, %v327, 0
        %vm342 = vcmask 1041408
        %v343 = vsel %vm342, %v336, 0
        %v345 = vsel %vm342, %v337, 0
        %347 = vmatprep.subr.mxu0 %v345
        %348 = vmatpush1.msra.mxu0 %v343
        %349 = vmatprep.subr.mxu0 0.0
        %350 = vmatpush1.msra.mxu0 0.0
        %351 = vmatprep.subr.mxu0 0.0
        %352 = vmatpush1.msra.mxu0 0.0
        %353 = vmatprep.subr.mxu0 0.0
        %354 = vmatpush1.msra.mxu0 0.0
        %355 = vmatprep.subr.mxu0 0.0
        %356 = vmatpush1.msra.mxu0 0.0
        %357 = vmatprep.subr.mxu0 0.0
        %358 = vmatpush1.msra.mxu0 0.0
        %359 = vmatprep.subr.mxu0 0.0
        %360 = vmatpush1.msra.mxu0 0.0
        %361 = vmatprep.subr.mxu0 0.0
        %362 = vmatpush1.msra.mxu0 0.0
        %363 = vmatprep.subr.mxu0 0.0
        %364 = vmatpush1.msra.mxu0 0.0
        %365 = vmatprep.subr.mxu0 0.0
        %366 = vmatpush1.msra.mxu0 0.0
        %367 = vmatprep.subr.mxu0 0.0
        %368 = vmatpush1.msra.mxu0 0.0
        %369 = vmatprep.subr.mxu0 0.0
        %370 = vmatpush1.msra.mxu0 0.0
        %371 = vmatprep.subr.mxu0 0.0
        %372 = vmatpush1.msra.mxu0 0.0
        %373 = vmatprep.subr.mxu0 0.0
        %374 = vmatpush1.msra.mxu0 0.0
        %375 = vmatprep.subr.mxu0 0.0
        %376 = vmatpush1.msra.mxu0 0.0
        %377 = vmatprep.subr.mxu0 0.0
        %378 = vmatpush1.msra.mxu0 0.0
        %379 = vmatprep.subr.mxu0 0.0
        %380 = vmatpush1.msra.mxu0 0.0
        %381 = vmatprep.subr.mxu0 0.0
        %382 = vmatpush1.msra.mxu0 0.0
        %383 = vmatprep.subr.mxu0 0.0
        %384 = vmatpush1.msra.mxu0 0.0
        %385 = vmatprep.subr.mxu0 0.0
        %386 = vmatpush1.msra.mxu0 0.0
        %387 = vmatprep.subr.mxu0 0.0
        %388 = vmatpush1.msra.mxu0 0.0
        %389 = vmatprep.subr.mxu0 0.0
        %390 = vmatpush1.msra.mxu0 0.0
        %391 = vmatprep.subr.mxu0 0.0
        %392 = vmatpush1.msra.mxu0 0.0
        %393 = vmatprep.subr.mxu0 0.0
        %394 = vmatpush1.msra.mxu0 0.0
        %395 = vmatprep.subr.mxu0 0.0
        %396 = vmatpush1.msra.mxu0 0.0
        %397 = vmatprep.subr.mxu0 0.0
        %398 = vmatpush1.msra.mxu0 0.0
        %399 = vmatprep.subr.mxu0 0.0
        %400 = vmatpush1.msra.mxu0 0.0
        %401 = vmatprep.subr.mxu0 0.0
        %402 = vmatpush1.msra.mxu0 0.0
        %403 = vmatprep.subr.mxu0 0.0
        %404 = vmatpush1.msra.mxu0 0.0
        %405 = vmatprep.subr.mxu0 0.0
        %406 = vmatpush1.msra.mxu0 0.0
        %407 = vmatprep.subr.mxu0 0.0
        %408 = vmatpush1.msra.mxu0 0.0
        %409 = vmatprep.subr.mxu0 0.0
        %410 = vmatpush1.msra.mxu0 0.0
        %411 = vmatprep.mubr.f32.mxu0 0.0
        %412 = vmatmul.mubr.f32.gmra.mrb[0].mxu0 %v340
        %v413 = vpop.f32.mrb[0].mxu0
        %v414 = vadd.f32 0.0, %v413
        %v415 = vpop.f32.mrb[0].mxu0
        %v416 = vadd.f32 0.0, %v415
        %417 = vdwg.mxu0
        %418 = vst [vmem:[%s229] sm:$0xff] %v414
        %419 = vst [vmem:[%s229 + $0x8] sm:$0xff] %v416
        %s420 = sand.u32 %s116, 1
        %s421 = scalar_lea.sflag [#allocation5], %s420
        %s422 = sand.u32 %s116, 1
        %s423 = smul.addr %s422, 16
        %s424 = scalar_lea.vmem [#allocation8], %s423
        // Predicated region
        $region45: #{tpu_custom_call.1} parent=31 // pred_check
          %p425 = pneg %p126
        $region46: #{tpu_custom_call.1} parent=31 // pred_check_branch
          %427 = sbr.rel (%p425) target = $region48
        $region47: #{tpu_custom_call.1} parent=31 // pred_region
          %s428 = smul.u32 2, %s26
          %s430 = ssub.s32 256, 256
          %431 = vsyncadd %s421, %s430
          %s432 = smul.addr %s25, 2
          %s433 = sadd.s32 %s428, %s432
          %s434 = smul.addr %s433, 128
          %s435 = scalar_lea.hbm %s3, %s434
          %s437 = sshll.u32 %s424, 4
          %s438 = int_to_ptr.vmem [resolvable:$true] %s437
          %440 = dma.vmem_to_hbm [thread:$0]  %s438, 256, %s435, %s421
        $region48: #{tpu_custom_call.1} parent=31 // pred_fallthru
          _
      $region32: #{tpu_custom_call.1} parent=5 // pred_fallthru
        _
      %p441 = scmp.le.s32.totalorder 2, %s16
      // Predicated region
      $region49: #{tpu_custom_call.1} parent=5 // pred_check
        %p442 = pneg %p441
      $region50: #{tpu_custom_call.1} parent=5 // pred_check_branch
        %444 = sbr.rel (%p442) target = $region52
      $region51: #{tpu_custom_call.1} parent=5 // pred_region
        %s445 = ssub.s32 %s16, 2
        // Predicated region
        $region53: #{tpu_custom_call.1} parent=51 // pred_check
          %p446 = pneg %p132
        $region54: #{tpu_custom_call.1} parent=51 // pred_check_branch
          %448 = sbr.rel (%p446) target = $region56
        $region55: #{tpu_custom_call.1} parent=51 // pred_region
          %s449 = sand.u32 %s117, 1
          %s450 = scalar_lea.sflag [#allocation5], %s449
          %s451 = sand.u32 %s117, 1
          %s452 = smul.addr %s451, 16
          %s453 = scalar_lea.vmem [#allocation8], %s452
          %454 = dma.done %s450, 256
        $region56: #{tpu_custom_call.1} parent=51 // pred_fallthru
          _
      $region52: #{tpu_custom_call.1} parent=5 // pred_fallthru
        _
    $region6: #{tpu_custom_call.1} parent=1 // loop_footer
      %s20 = sadd.s32 1, %s16
    $region7: #{tpu_custom_call.1} parent=1 // loop_footer_branch
      %15 = sbr.rel target = $region3
    $region8: #{tpu_custom_call.1} parent=1 // loop_exit
      _
    %455 = vsyncpa [#allocation4], 1
    %s456 = scalar_lea.sflag [#allocation4], 1
    %457 = vsyncpa %s456, 1
    %458 = vsyncpa [#allocation7], 1
    %459 = vsyncpa [#allocation5], 1
    %s460 = scalar_lea.sflag [#allocation5], 1
    %461 = vsyncpa %s460, 1

</llo_original>
